<compile_context>
chip_gen: v7x
topology: tpu7x:2x2x1
jax: 0.10.0
libtpu: 0.0.40
codegen_flags: <defaults>
</compile_context>

<pallas_src>
import functools

import jax
import jax.numpy as jnp
import numpy as np
from jax.experimental import pallas as pl
from jax.experimental.pallas import tpu as pltpu

EMBEDDING_DIM = 50
WINDOW_SIZE = 1
EXAMPLE_SIZE = (2 * WINDOW_SIZE + 1) * EMBEDDING_DIM  # 150
HIDDEN = 256
NUM_CLASSES = 25

OUT_PAD = 128        # lane-dense padded output width (sliced back to 25)
MAX_ROW_TILE = 1024  # batch rows per grid step (few MiB of VMEM incl. buffers)


def _round_up(n: int, m: int) -> int:
    return ((n + m - 1) // m) * m


def _make_kernel(use_bf16: bool):
    """Build the MLP kernel body; `use_bf16` selects MXU operand dtype."""
    cdt = jnp.bfloat16 if use_bf16 else jnp.float32

    def kernel(x_ref, w1_ref, b1_ref, w2_ref, b2_ref, w3_ref, b3_ref, o_ref):
        # Layer 1: Linear(150 -> 256) + ReLU.  f32 accumulate on the MXU;
        # bias add / ReLU stay f32 (v5e VPU has no bf16).
        x = x_ref[...].astype(cdt)
        h1 = jnp.dot(x, w1_ref[...].astype(cdt),
                     preferred_element_type=jnp.float32) + b1_ref[...]
        h1 = jnp.maximum(h1, 0.0)

        # Layer 2: Linear(256 -> 256) + ReLU.
        h2 = jnp.dot(h1.astype(cdt), w2_ref[...].astype(cdt),
                     preferred_element_type=jnp.float32) + b2_ref[...]
        h2 = jnp.maximum(h2, 0.0)

        # Layer 3: Linear(256 -> 128_padded), no activation; lane-dense store.
        o_ref[...] = (
            jnp.dot(h2.astype(cdt), w3_ref[...].astype(cdt),
                    preferred_element_type=jnp.float32) + b3_ref[...]
        ).astype(o_ref.dtype)

    return kernel


@functools.partial(jax.jit, static_argnames=("use_bf16",))
def three_layer_net(x, w1, b1, w2, b2, w3_p, b3_p, *, use_bf16=False):
    """x: [B, 150] f32.  w3_p/b3_p are lane-padded to 128.  Returns [B, 25]."""
    batch = x.shape[0]

    # Row tile: as large as possible (amortize ~0.35us/step overhead) but
    # capped at ceil(batch/2) rounded to 8 so the grid has >= 2 steps when
    # possible (both v7x TensorCores get work).  Partial last block is fine:
    # rows are independent and OOB output stores are masked.
    row_tile = min(MAX_ROW_TILE, _round_up(pl.cdiv(batch, 2), 8))
    n_tiles = pl.cdiv(batch, row_tile)

    out_padded = pl.pallas_call(
        _make_kernel(use_bf16),
        out_shape=jax.ShapeDtypeStruct((batch, OUT_PAD), jnp.float32),
        grid=(n_tiles,),
        in_specs=[
            # Batch-tiled activation; last dim 150 == full array dim (legal),
            # no HBM-side K-padding needed.
            pl.BlockSpec((row_tile, EXAMPLE_SIZE), lambda i: (i, 0)),
            # Weights & biases: constant block index -> VMEM-resident.
            pl.BlockSpec((EXAMPLE_SIZE, HIDDEN), lambda i: (0, 0)),
            pl.BlockSpec((1, HIDDEN), lambda i: (0, 0)),
            pl.BlockSpec((HIDDEN, HIDDEN), lambda i: (0, 0)),
            pl.BlockSpec((1, HIDDEN), lambda i: (0, 0)),
            pl.BlockSpec((HIDDEN, OUT_PAD), lambda i: (0, 0)),
            pl.BlockSpec((1, OUT_PAD), lambda i: (0, 0)),
        ],
        out_specs=pl.BlockSpec((row_tile, OUT_PAD), lambda i: (i, 0)),
        compiler_params=pltpu.CompilerParams(
            dimension_semantics=("parallel",),  # megacore split on v7x
        ),
    )(x, w1, b1, w2, b2, w3_p, b3_p)

    return out_padded[:, :NUM_CLASSES]


def init_params(key):
    """Deterministic init matching torch: normal(0, 1/sqrt(fan_in)), zero bias.

    Weights are stored as [in, out] (transposed vs. nn.Linear's [out, in])."""
    k1, k2, k3 = jax.random.split(key, 3)
    w1 = (jax.random.normal(k1, (EXAMPLE_SIZE, HIDDEN), jnp.float32)
          / np.sqrt(EXAMPLE_SIZE))
    b1 = jnp.zeros((1, HIDDEN), jnp.float32)
    w2 = (jax.random.normal(k2, (HIDDEN, HIDDEN), jnp.float32)
          / np.sqrt(HIDDEN))
    b2 = jnp.zeros((1, HIDDEN), jnp.float32)
    w3 = (jax.random.normal(k3, (HIDDEN, NUM_CLASSES), jnp.float32)
          / np.sqrt(HIDDEN))
    b3 = jnp.zeros((1, NUM_CLASSES), jnp.float32)
    return w1, b1, w2, b2, w3, b3


def prepare_params(params):
    """One-time, out-of-jit lane-padding of the output layer (25 -> 128)."""
    w1, b1, w2, b2, w3, b3 = params
    w3_p = jnp.pad(w3, ((0, 0), (0, OUT_PAD - NUM_CLASSES)))
    b3_p = jnp.pad(b3, ((0, 0), (0, OUT_PAD - NUM_CLASSES)))
    return w1, b1, w2, b2, w3_p, b3_p


def reference_forward(x, w1, b1, w2, b2, w3, b3):
    h1 = jnp.maximum(x @ w1 + b1, 0.0)
    h2 = jnp.maximum(h1 @ w2 + b2, 0.0)
    return h2 @ w3 + b3


if __name__ == "__main__":
    key = jax.random.PRNGKey(0)
    pkey, xkey1, xkey2, xkey3 = jax.random.split(key, 4)

    params = init_params(pkey)
    kernel_params = prepare_params(params)   # padded once, reused every call

    # Small, tile-aligned batch (exact f32 path).
    batch = 8
    x = jax.random.normal(xkey1, (batch, EXAMPLE_SIZE), jnp.float32)
    out = jax.block_until_ready(three_layer_net(x, *kernel_params))
    ref = reference_forward(x, *params)
    np.testing.assert_allclose(np.asarray(out), np.asarray(ref),
                               rtol=1e-5, atol=1e-5)
    assert out.shape == (batch, NUM_CLASSES)

    # Ragged batch: exercises the partial-last-block path (no padding ops).
    batch2 = 37
    x2 = jax.random.normal(xkey2, (batch2, EXAMPLE_SIZE), jnp.float32)
    out2 = jax.block_until_ready(three_layer_net(x2, *kernel_params))
    ref2 = reference_forward(x2, *params)
    np.testing.assert_allclose(np.asarray(out2), np.asarray(ref2),
                               rtol=1e-5, atol=1e-5)
    assert out2.shape == (batch2, NUM_CLASSES)

    # Optional bf16-operand fast path (f32 accumulate): looser tolerance.
    batch3 = 64
    x3 = jax.random.normal(xkey3, (batch3, EXAMPLE_SIZE), jnp.float32)
    out3 = jax.block_until_ready(
        three_layer_net(x3, *kernel_params, use_bf16=True))
    ref3 = reference_forward(x3, *params)
    np.testing.assert_allclose(np.asarray(out3), np.asarray(ref3),
                               rtol=5e-2, atol=5e-2)
    assert out3.shape == (batch3, NUM_CLASSES)

    print("KERNEL_OK")
</pallas_src>

<mosaic_0001>
module attributes {stable_mosaic.version = 11 : i64} {
  func.func @kernel(%arg0: i32, %arg1: memref<8x150xf32, #tpu.memory_space<vmem>>, %arg2: memref<150x256xf32, #tpu.memory_space<vmem>>, %arg3: memref<1x256xf32, #tpu.memory_space<vmem>>, %arg4: memref<256x256xf32, #tpu.memory_space<vmem>>, %arg5: memref<1x256xf32, #tpu.memory_space<vmem>>, %arg6: memref<256x128xf32, #tpu.memory_space<vmem>>, %arg7: memref<1x128xf32, #tpu.memory_space<vmem>>, %arg8: memref<8x128xf32, #tpu.memory_space<vmem>>) attributes {dimension_semantics = [#tpu.dimension_semantics<parallel>], iteration_bounds = array<i64: 1>, scalar_prefetch = 0 : i64, scratch_operands = 0 : i64, tpu.core_type = #tpu.core_type<tc>, window_params = [{transform_indices = @transform_0, window_bounds = array<i64: 8, 150>}, {pipeline_mode = #tpu.pipeline_mode<synchronous>, transform_indices = @transform_1, window_bounds = array<i64: 150, 256>}, {pipeline_mode = #tpu.pipeline_mode<synchronous>, transform_indices = @transform_2, window_bounds = array<i64: 1, 256>}, {pipeline_mode = #tpu.pipeline_mode<synchronous>, transform_indices = @transform_3, window_bounds = array<i64: 256, 256>}, {pipeline_mode = #tpu.pipeline_mode<synchronous>, transform_indices = @transform_4, window_bounds = array<i64: 1, 256>}, {pipeline_mode = #tpu.pipeline_mode<synchronous>, transform_indices = @transform_5, window_bounds = array<i64: 256, 128>}, {pipeline_mode = #tpu.pipeline_mode<synchronous>, transform_indices = @transform_6, window_bounds = array<i64: 1, 128>}, {transform_indices = @transform_7, window_bounds = array<i64: 8, 128>}]} {
    %c0 = arith.constant 0 : index
    %c0_0 = arith.constant 0 : index
    %0 = vector.load %arg1[%c0, %c0_0] : memref<8x150xf32, #tpu.memory_space<vmem>>, vector<8x150xf32>
    %c0_1 = arith.constant 0 : index
    %c0_2 = arith.constant 0 : index
    %1 = vector.load %arg2[%c0_1, %c0_2] : memref<150x256xf32, #tpu.memory_space<vmem>>, vector<150x256xf32>
    %cst = arith.constant dense<0.000000e+00> : vector<8x256xf32>
    %2 = tpu.matmul %0, %1, %cst {dimension_numbers = #tpu.dot_dimension_numbers<[1], [0], [0], [1], [0, 0, 1, 1], [], []>} : vector<8x150xf32>, vector<150x256xf32>, vector<8x256xf32> -> vector<8x256xf32>
    %c0_3 = arith.constant 0 : index
    %c0_4 = arith.constant 0 : index
    %3 = vector.load %arg3[%c0_3, %c0_4] : memref<1x256xf32, #tpu.memory_space<vmem>>, vector<1x256xf32>
    %4 = vector.broadcast %3 : vector<1x256xf32> to vector<8x256xf32>
    %5 = arith.addf %2, %4 : vector<8x256xf32>
    %cst_5 = arith.constant 0.000000e+00 : f32
    %6 = vector.broadcast %cst_5 : f32 to vector<8x256xf32>
    %7 = arith.maximumf %5, %6 : vector<8x256xf32>
    %c0_6 = arith.constant 0 : index
    %c0_7 = arith.constant 0 : index
    %8 = vector.load %arg4[%c0_6, %c0_7] : memref<256x256xf32, #tpu.memory_space<vmem>>, vector<256x256xf32>
    %cst_8 = arith.constant dense<0.000000e+00> : vector<8x256xf32>
    %9 = tpu.matmul %7, %8, %cst_8 {dimension_numbers = #tpu.dot_dimension_numbers<[1], [0], [0], [1], [0, 0, 1, 1], [], []>} : vector<8x256xf32>, vector<256x256xf32>, vector<8x256xf32> -> vector<8x256xf32>
    %c0_9 = arith.constant 0 : index
    %c0_10 = arith.constant 0 : index
    %10 = vector.load %arg5[%c0_9, %c0_10] : memref<1x256xf32, #tpu.memory_space<vmem>>, vector<1x256xf32>
    %11 = vector.broadcast %10 : vector<1x256xf32> to vector<8x256xf32>
    %12 = arith.addf %9, %11 : vector<8x256xf32>
    %cst_11 = arith.constant 0.000000e+00 : f32
    %13 = vector.broadcast %cst_11 : f32 to vector<8x256xf32>
    %14 = arith.maximumf %12, %13 : vector<8x256xf32>
    %c0_12 = arith.constant 0 : index
    %c0_13 = arith.constant 0 : index
    %15 = vector.load %arg6[%c0_12, %c0_13] : memref<256x128xf32, #tpu.memory_space<vmem>>, vector<256x128xf32>
    %cst_14 = arith.constant dense<0.000000e+00> : vector<8x128xf32>
    %16 = tpu.matmul %14, %15, %cst_14 {dimension_numbers = #tpu.dot_dimension_numbers<[1], [0], [0], [1], [0, 0, 1, 1], [], []>} : vector<8x256xf32>, vector<256x128xf32>, vector<8x128xf32> -> vector<8x128xf32>
    %c0_15 = arith.constant 0 : index
    %c0_16 = arith.constant 0 : index
    %17 = vector.load %arg7[%c0_15, %c0_16] : memref<1x128xf32, #tpu.memory_space<vmem>>, vector<1x128xf32>
    %18 = vector.broadcast %17 : vector<1x128xf32> to vector<8x128xf32>
    %19 = arith.addf %16, %18 : vector<8x128xf32>
    %c0_17 = arith.constant 0 : index
    %c0_18 = arith.constant 0 : index
    %20 = vector.load %arg8[%c0_17, %c0_18] : memref<8x128xf32, #tpu.memory_space<vmem>>, vector<8x128xf32>
    tpu.vector_store %arg8[%c0_17, %c0_18], %19 {strides = array<i32>} : memref<8x128xf32, #tpu.memory_space<vmem>>, vector<8x128xf32>,
    return
  }
  func.func @transform_0(%arg0: i32) -> (i32, i32) {
    %c0_i32 = arith.constant 0 : i32
    %c0_i32_0 = arith.constant 0 : i32
    return %arg0, %c0_i32 : i32, i32
  }
  func.func @transform_1(%arg0: i32) -> (i32, i32) {
    %c0_i32 = arith.constant 0 : i32
    %c0_i32_0 = arith.constant 0 : i32
    %c0_i32_1 = arith.constant 0 : i32
    return %c0_i32, %c0_i32_0 : i32, i32
  }
  func.func @transform_2(%arg0: i32) -> (i32, i32) {
    %c0_i32 = arith.constant 0 : i32
    %c0_i32_0 = arith.constant 0 : i32
    %c0_i32_1 = arith.constant 0 : i32
    return %c0_i32, %c0_i32_0 : i32, i32
  }
  func.func @transform_3(%arg0: i32) -> (i32, i32) {
    %c0_i32 = arith.constant 0 : i32
    %c0_i32_0 = arith.constant 0 : i32
    %c0_i32_1 = arith.constant 0 : i32
    return %c0_i32, %c0_i32_0 : i32, i32
  }
  func.func @transform_4(%arg0: i32) -> (i32, i32) {
    %c0_i32 = arith.constant 0 : i32
    %c0_i32_0 = arith.constant 0 : i32
    %c0_i32_1 = arith.constant 0 : i32
    return %c0_i32, %c0_i32_0 : i32, i32
  }
  func.func @transform_5(%arg0: i32) -> (i32, i32) {
    %c0_i32 = arith.constant 0 : i32
    %c0_i32_0 = arith.constant 0 : i32
    %c0_i32_1 = arith.constant 0 : i32
    return %c0_i32, %c0_i32_0 : i32, i32
  }
  func.func @transform_6(%arg0: i32) -> (i32, i32) {
    %c0_i32 = arith.constant 0 : i32
    %c0_i32_0 = arith.constant 0 : i32
    %c0_i32_1 = arith.constant 0 : i32
    return %c0_i32, %c0_i32_0 : i32, i32
  }
  func.func @transform_7(%arg0: i32) -> (i32, i32) {
    %c0_i32 = arith.constant 0 : i32
    %c0_i32_0 = arith.constant 0 : i32
    return %arg0, %c0_i32 : i32, i32
  }
}

</mosaic_0001>

<llo_original>
// kernel: three_layer_net.1
$region0: #{three_layer_net.1}
  #allocation0 [shape = 'u32[]', space=smem, size = 0x4, offset = 0x4, fixed_abs, tag = 'smem constant byte address 0x4 - core index']
  #allocation1 [shape = 'u32[144,128]{1,0:T(1,128)}', space=vmem, size = 0x12000, scoped, tag = 'internal scratch']
  %s0 = inlined_call_operand.hbm [shape: f32[8,150], index: 0, kind: input, shape index: {}]
  %s1 = inlined_call_operand.hbm [shape: f32[150,256], index: 1, kind: input, shape index: {}]
  %s2 = inlined_call_operand.vmem [shape: f32[1,256], index: 2, kind: input, shape index: {}]
  %s3 = inlined_call_operand.hbm [shape: f32[256,256], index: 3, kind: input, shape index: {}]
  %s4 = inlined_call_operand.vmem [shape: f32[1,256], index: 4, kind: input, shape index: {}]
  %s5 = inlined_call_operand.hbm [shape: f32[256,128], index: 5, kind: input, shape index: {}]
  %s6 = inlined_call_operand.vmem [shape: f32[1,128], index: 6, kind: input, shape index: {}]
  %s7 = inlined_call_operand.hbm [shape: f32[8,128], index: 7, kind: output, shape index: {}]
  %s8 = sld [smem:[#allocation0]]
  $region54: #{three_layer_net.1} parent=0
    _
  %s10 = ssub.s32 1, %s8
  %s11 = scalar_select 0, %s10, %s8
  $region1: #{three_layer_net.1} parent=0
    #allocation2 [shape = 'u8[8192]{0}', space=vmem, size = 0x2000, scoped, tag = 'input window, operand 0, single buffered']
    #allocation3 [shape = 's32[1]{0}', space=sflag, size = 0x4, scoped, tag = 'scoped memory for three_layer_net.1']
    #allocation4 [shape = 's32[1]{0}', space=sflag, size = 0x4, scoped, tag = 'scoped memory for three_layer_net.1']
    #allocation5 [shape = 'u8[155648]{0}', space=vmem, size = 0x26000, scoped, tag = 'input window, operand 1, single buffered']
    #allocation6 [shape = 's32[1]{0}', space=sflag, size = 0x4, scoped, tag = 'scoped memory for three_layer_net.1']
    #allocation7 [shape = 'u8[262144]{0}', space=vmem, size = 0x40000, scoped, tag = 'input window, operand 3, single buffered']
    #allocation8 [shape = 'u8[131072]{0}', space=vmem, size = 0x20000, scoped, tag = 'input window, operand 5, single buffered']
    #allocation9 [shape = 's32[1]{0}', space=sflag, size = 0x4, scoped, tag = 'scoped memory for three_layer_net.1']
    #allocation10 [shape = 'u8[4096]{0}', space=vmem, size = 0x1000, scoped, tag = 'output window, operand 0, single buffered']
    %12 = vsyncpa [#allocation3], 0
    %13 = vsyncpa [#allocation6], 0
    %14 = vsyncpa [#allocation9], 0
    %15 = vsyncpa [#allocation4], 0
    // Predicated region
    $region2: #{three_layer_net.1} parent=1 // pred_check
      _
    $region3: #{three_layer_net.1} parent=1 // pred_check_branch
      %17 = sbr.rel (0) target = $region5
    $region4: #{three_layer_net.1} parent=1 // pred_region
      %s19 = ssub.s32 256, 256
      %20 = vsyncadd [#allocation3], %s19
      %s22 = sshll.u32 [#allocation2], 4
      %s23 = int_to_ptr.vmem [resolvable:$true] %s22
      %25 = dma.hbm_to_vmem [thread:$0]  %s0, 256, %s23, [#allocation3]
    $region5: #{three_layer_net.1} parent=1 // pred_fallthru
      _
    // Predicated region
    $region6: #{three_layer_net.1} parent=1 // pred_check
      _
    $region7: #{three_layer_net.1} parent=1 // pred_check_branch
      %27 = sbr.rel (0) target = $region9
    $region8: #{three_layer_net.1} parent=1 // pred_region
      %s29 = ssub.s32 4864, 4864
      %30 = vsyncadd [#allocation6], %s29
      %s31 = sshll.u32 [#allocation5], 4
      %s32 = int_to_ptr.vmem [resolvable:$true] %s31
      %37 = dma.hbm_to_vmem [thread:$0]  %s1, 4864, %s32, [#allocation6], 256, 256, 16
    $region9: #{three_layer_net.1} parent=1 // pred_fallthru
      _
    // Predicated region
    $region10: #{three_layer_net.1} parent=1 // pred_check
      _
    $region11: #{three_layer_net.1} parent=1 // pred_check_branch
      %39 = sbr.rel (0) target = $region13
    $region12: #{three_layer_net.1} parent=1 // pred_region
      _
    $region13: #{three_layer_net.1} parent=1 // pred_fallthru
      _
    // Predicated region
    $region14: #{three_layer_net.1} parent=1 // pred_check
      _
    $region15: #{three_layer_net.1} parent=1 // pred_check_branch
      %41 = sbr.rel (0) target = $region17
    $region16: #{three_layer_net.1} parent=1 // pred_region
      %s43 = ssub.s32 8192, 8192
      %44 = vsyncadd [#allocation6], %s43
      %s45 = sshll.u32 [#allocation7], 4
      %s46 = int_to_ptr.vmem [resolvable:$true] %s45
      %51 = dma.hbm_to_vmem [thread:$0]  %s3, 8192, %s46, [#allocation6], 256, 256, 16
    $region17: #{three_layer_net.1} parent=1 // pred_fallthru
      _
    // Predicated region
    $region18: #{three_layer_net.1} parent=1 // pred_check
      _
    $region19: #{three_layer_net.1} parent=1 // pred_check_branch
      %53 = sbr.rel (0) target = $region21
    $region20: #{three_layer_net.1} parent=1 // pred_region
      _
    $region21: #{three_layer_net.1} parent=1 // pred_fallthru
      _
    // Predicated region
    $region22: #{three_layer_net.1} parent=1 // pred_check
      _
    $region23: #{three_layer_net.1} parent=1 // pred_check_branch
      %55 = sbr.rel (0) target = $region25
    $region24: #{three_layer_net.1} parent=1 // pred_region
      %s57 = ssub.s32 4096, 4096
      %58 = vsyncadd [#allocation9], %s57
      %s59 = sshll.u32 [#allocation8], 4
      %s60 = int_to_ptr.vmem [resolvable:$true] %s59
      %65 = dma.hbm_to_vmem [thread:$0]  %s5, 4096, %s60, [#allocation9], 128, 128, 8
    $region25: #{three_layer_net.1} parent=1 // pred_fallthru
      _
    // Predicated region
    $region26: #{three_layer_net.1} parent=1 // pred_check
      _
    $region27: #{three_layer_net.1} parent=1 // pred_check_branch
      %67 = sbr.rel (0) target = $region29
    $region28: #{three_layer_net.1} parent=1 // pred_region
      _
    $region29: #{three_layer_net.1} parent=1 // pred_fallthru
      _
    // Predicated region
    $region30: #{three_layer_net.1} parent=1 // pred_check
      _
    $region31: #{three_layer_net.1} parent=1 // pred_check_branch
      %69 = sbr.rel (0) target = $region33
    $region32: #{three_layer_net.1} parent=1 // pred_region
      %70 = dma.done [#allocation3], 256
    $region33: #{three_layer_net.1} parent=1 // pred_fallthru
      _
    // Predicated region
    $region34: #{three_layer_net.1} parent=1 // pred_check
      _
    $region35: #{three_layer_net.1} parent=1 // pred_check_branch
      %72 = sbr.rel (0) target = $region37
    $region36: #{three_layer_net.1} parent=1 // pred_region
      %73 = dma.done [#allocation6], 4864
    $region37: #{three_layer_net.1} parent=1 // pred_fallthru
      _
    // Predicated region
    $region38: #{three_layer_net.1} parent=1 // pred_check
      _
    $region39: #{three_layer_net.1} parent=1 // pred_check_branch
      %75 = sbr.rel (0) target = $region41
    $region40: #{three_layer_net.1} parent=1 // pred_region
      %76 = dma.done [#allocation6], 8192
    $region41: #{three_layer_net.1} parent=1 // pred_fallthru
      _
    // Predicated region
    $region42: #{three_layer_net.1} parent=1 // pred_check
      _
    $region43: #{three_layer_net.1} parent=1 // pred_check_branch
      %78 = sbr.rel (0) target = $region45
    $region44: #{three_layer_net.1} parent=1 // pred_region
      %79 = dma.done [#allocation9], 4096
    $region45: #{three_layer_net.1} parent=1 // pred_fallthru
      _
    %v80 = vld [vmem:[#allocation2] sm:$0xff]
    %v81 = vld [vmem:[#allocation2 + $0x8] sm:$0xff]
    %v82 = vld [vmem:[#allocation5] sm:$0xff]
    %v83 = vld [vmem:[#allocation5 + $0x8] sm:$0xff]
    %v84 = vld [vmem:[#allocation5 + $0x10] sm:$0xff]
    %v85 = vld [vmem:[#allocation5 + $0x18] sm:$0xff]
    %v86 = vld [vmem:[#allocation5 + $0x20] sm:$0xff]
    %v87 = vld [vmem:[#allocation5 + $0x28] sm:$0xff]
    %v88 = vld [vmem:[#allocation5 + $0x30] sm:$0xff]
    %v89 = vld [vmem:[#allocation5 + $0x38] sm:$0xff]
    %v90 = vld [vmem:[#allocation5 + $0x40] sm:$0xff]
    %v91 = vld [vmem:[#allocation5 + $0x48] sm:$0xff]
    %v92 = vld [vmem:[#allocation5 + $0x50] sm:$0xff]
    %v93 = vld [vmem:[#allocation5 + $0x58] sm:$0xff]
    %v94 = vld [vmem:[#allocation5 + $0x60] sm:$0xff]
    %v95 = vld [vmem:[#allocation5 + $0x68] sm:$0xff]
    %v96 = vld [vmem:[#allocation5 + $0x70] sm:$0xff]
    %v97 = vld [vmem:[#allocation5 + $0x78] sm:$0xff]
    %v98 = vld [vmem:[#allocation5 + $0x80] sm:$0xff]
    %v99 = vld [vmem:[#allocation5 + $0x88] sm:$0xff]
    %v100 = vld [vmem:[#allocation5 + $0x90] sm:$0xff]
    %v101 = vld [vmem:[#allocation5 + $0x98] sm:$0xff]
    %v102 = vld [vmem:[#allocation5 + $0xa0] sm:$0xff]
    %v103 = vld [vmem:[#allocation5 + $0xa8] sm:$0xff]
    %v104 = vld [vmem:[#allocation5 + $0xb0] sm:$0xff]
    %v105 = vld [vmem:[#allocation5 + $0xb8] sm:$0xff]
    %v106 = vld [vmem:[#allocation5 + $0xc0] sm:$0xff]
    %v107 = vld [vmem:[#allocation5 + $0xc8] sm:$0xff]
    %v108 = vld [vmem:[#allocation5 + $0xd0] sm:$0xff]
    %v109 = vld [vmem:[#allocation5 + $0xd8] sm:$0xff]
    %v110 = vld [vmem:[#allocation5 + $0xe0] sm:$0xff]
    %v111 = vld [vmem:[#allocation5 + $0xe8] sm:$0xff]
    %v112 = vld [vmem:[#allocation5 + $0xf0] sm:$0xff]
    %v113 = vld [vmem:[#allocation5 + $0xf8] sm:$0xff]
    %v114 = vld [vmem:[#allocation5 + $0x100] sm:$0xff]
    %v115 = vld [vmem:[#allocation5 + $0x108] sm:$0xff]
    %v116 = vld [vmem:[#allocation5 + $0x110] sm:$0xff]
    %v117 = vld [vmem:[#allocation5 + $0x118] sm:$0xff]
    %v118 = vld [vmem:[#allocation5 + $0x120] sm:$0x3f]
    %v119 = vld [vmem:[#allocation5 + $0x128] sm:$0x3f]
    %v120 = vld [vmem:[%s2] sm:$0x3]
    %v122 = vlaneseq
    %v123 = vshrl.u32 %v122, 7
    %v124 = vsub.s32 0, %v123
    %v125 = vrot.slane %v120, %v124
    %v126 = vlaneseq
    %v127 = vshrl.u32 %v126, 7
    %v128 = vsub.s32 1, %v127
    %v129 = vrot.slane %v120, %v128
    %vm132 = vcmask 179200
    %v134 = vsel %vm132, %v81, 0
    %vm136 = vcmask 1045504
    %v138 = vsel %vm136, %v118, 0
    %v141 = vsel %vm136, %v119, 0
    %143 = vmatprep.subr.mxu0 %v83
    %144 = vmatpush1.msra.mxu0 %v82
    %145 = vmatprep.subr.mxu0 %v85
    %146 = vmatpush1.msra.mxu0 %v84
    %147 = vmatprep.subr.mxu0 %v87
    %148 = vmatpush1.msra.mxu0 %v86
    %149 = vmatprep.subr.mxu0 %v89
    %150 = vmatpush1.msra.mxu0 %v88
    %151 = vmatprep.subr.mxu0 %v91
    %152 = vmatpush1.msra.mxu0 %v90
    %153 = vmatprep.subr.mxu0 %v93
    %154 = vmatpush1.msra.mxu0 %v92
    %155 = vmatprep.subr.mxu0 %v95
    %156 = vmatpush1.msra.mxu0 %v94
    %157 = vmatprep.subr.mxu0 %v97
    %158 = vmatpush1.msra.mxu0 %v96
    %159 = vmatprep.subr.mxu0 %v99
    %160 = vmatpush1.msra.mxu0 %v98
    %161 = vmatprep.subr.mxu0 %v101
    %162 = vmatpush1.msra.mxu0 %v100
    %163 = vmatprep.subr.mxu0 %v103
    %164 = vmatpush1.msra.mxu0 %v102
    %165 = vmatprep.subr.mxu0 %v105
    %166 = vmatpush1.msra.mxu0 %v104
    %167 = vmatprep.subr.mxu0 %v107
    %168 = vmatpush1.msra.mxu0 %v106
    %169 = vmatprep.subr.mxu0 %v109
    %170 = vmatpush1.msra.mxu0 %v108
    %171 = vmatprep.subr.mxu0 %v111
    %172 = vmatpush1.msra.mxu0 %v110
    %173 = vmatprep.subr.mxu0 %v113
    %174 = vmatpush1.msra.mxu0 %v112
    %175 = vmatprep.subr.mxu0 %v115
    %176 = vmatpush1.msra.mxu0 %v114
    %177 = vmatprep.subr.mxu0 %v117
    %178 = vmatpush1.msra.mxu0 %v116
    %179 = vmatprep.subr.mxu0 %v141
    %180 = vmatpush1.msra.mxu0 %v138
    %181 = vmatprep.subr.mxu0 0.0
    %182 = vmatpush1.msra.mxu0 0.0
    %183 = vmatprep.subr.mxu0 0.0
    %184 = vmatpush1.msra.mxu0 0.0
    %185 = vmatprep.subr.mxu0 0.0
    %186 = vmatpush1.msra.mxu0 0.0
    %187 = vmatprep.subr.mxu0 0.0
    %188 = vmatpush1.msra.mxu0 0.0
    %189 = vmatprep.subr.mxu0 0.0
    %190 = vmatpush1.msra.mxu0 0.0
    %191 = vmatprep.subr.mxu0 0.0
    %192 = vmatpush1.msra.mxu0 0.0
    %193 = vmatprep.subr.mxu0 0.0
    %194 = vmatpush1.msra.mxu0 0.0
    %195 = vmatprep.subr.mxu0 0.0
    %196 = vmatpush1.msra.mxu0 0.0
    %197 = vmatprep.subr.mxu0 0.0
    %198 = vmatpush1.msra.mxu0 0.0
    %199 = vmatprep.subr.mxu0 0.0
    %200 = vmatpush1.msra.mxu0 0.0
    %201 = vmatprep.subr.mxu0 0.0
    %202 = vmatpush1.msra.mxu0 0.0
    %203 = vmatprep.subr.mxu0 0.0
    %204 = vmatpush1.msra.mxu0 0.0
    %205 = vmatprep.subr.mxu0 0.0
    %206 = vmatpush1.msra.mxu0 0.0
    %207 = vmatprep.mubr.f32.mxu0 %v134
    %208 = vmatmul.mubr.f32.gmra.mrb[0].mxu0 %v80
    %v209 = vpop.f32.mrb[0].mxu0
    %v210 = vadd.f32 %v125, %v209
    %v211 = vpop.f32.mrb[0].mxu0
    %v212 = vadd.f32 %v129, %v211
    %213 = vdwg.mxu0
    %v214 = vmax.f32 %v210, 0.0
    %v215 = vmax.f32 %v212, 0.0
    %v216 = vld [vmem:[#allocation7] sm:$0xff]
    %v217 = vld [vmem:[#allocation7 + $0x8] sm:$0xff]
    %v218 = vld [vmem:[#allocation7 + $0x10] sm:$0xff]
    %v219 = vld [vmem:[#allocation7 + $0x18] sm:$0xff]
    %v220 = vld [vmem:[#allocation7 + $0x20] sm:$0xff]
    %v221 = vld [vmem:[#allocation7 + $0x28] sm:$0xff]
    %v222 = vld [vmem:[#allocation7 + $0x30] sm:$0xff]
    %v223 = vld [vmem:[#allocation7 + $0x38] sm:$0xff]
    %v224 = vld [vmem:[#allocation7 + $0x40] sm:$0xff]
    %v225 = vld [vmem:[#allocation7 + $0x48] sm:$0xff]
    %v226 = vld [vmem:[#allocation7 + $0x50] sm:$0xff]
    %v227 = vld [vmem:[#allocation7 + $0x58] sm:$0xff]
    %v228 = vld [vmem:[#allocation7 + $0x60] sm:$0xff]
    %v229 = vld [vmem:[#allocation7 + $0x68] sm:$0xff]
    %v230 = vld [vmem:[#allocation7 + $0x70] sm:$0xff]
    %v231 = vld [vmem:[#allocation7 + $0x78] sm:$0xff]
    %v232 = vld [vmem:[#allocation7 + $0x80] sm:$0xff]
    %v233 = vld [vmem:[#allocation7 + $0x88] sm:$0xff]
    %v234 = vld [vmem:[#allocation7 + $0x90] sm:$0xff]
    %v235 = vld [vmem:[#allocation7 + $0x98] sm:$0xff]
    %v236 = vld [vmem:[#allocation7 + $0xa0] sm:$0xff]
    %v237 = vld [vmem:[#allocation7 + $0xa8] sm:$0xff]
    %v238 = vld [vmem:[#allocation7 + $0xb0] sm:$0xff]
    %v239 = vld [vmem:[#allocation7 + $0xb8] sm:$0xff]
    %v240 = vld [vmem:[#allocation7 + $0xc0] sm:$0xff]
    %v241 = vld [vmem:[#allocation7 + $0xc8] sm:$0xff]
    %v242 = vld [vmem:[#allocation7 + $0xd0] sm:$0xff]
    %v243 = vld [vmem:[#allocation7 + $0xd8] sm:$0xff]
    %v244 = vld [vmem:[#allocation7 + $0xe0] sm:$0xff]
    %v245 = vld [vmem:[#allocation7 + $0xe8] sm:$0xff]
    %v246 = vld [vmem:[#allocation7 + $0xf0] sm:$0xff]
    %v247 = vld [vmem:[#allocation7 + $0xf8] sm:$0xff]
    %v248 = vld [vmem:[#allocation7 + $0x100] sm:$0xff]
    %v249 = vld [vmem:[#allocation7 + $0x108] sm:$0xff]
    %v250 = vld [vmem:[#allocation7 + $0x110] sm:$0xff]
    %v251 = vld [vmem:[#allocation7 + $0x118] sm:$0xff]
    %v252 = vld [vmem:[#allocation7 + $0x120] sm:$0xff]
    %v253 = vld [vmem:[#allocation7 + $0x128] sm:$0xff]
    %v254 = vld [vmem:[#allocation7 + $0x130] sm:$0xff]
    %v255 = vld [vmem:[#allocation7 + $0x138] sm:$0xff]
    %v256 = vld [vmem:[#allocation7 + $0x140] sm:$0xff]
    %v257 = vld [vmem:[#allocation7 + $0x148] sm:$0xff]
    %v258 = vld [vmem:[#allocation7 + $0x150] sm:$0xff]
    %v259 = vld [vmem:[#allocation7 + $0x158] sm:$0xff]
    %v260 = vld [vmem:[#allocation7 + $0x160] sm:$0xff]
    %v261 = vld [vmem:[#allocation7 + $0x168] sm:$0xff]
    %v262 = vld [vmem:[#allocation7 + $0x170] sm:$0xff]
    %v263 = vld [vmem:[#allocation7 + $0x178] sm:$0xff]
    %v264 = vld [vmem:[#allocation7 + $0x180] sm:$0xff]
    %v265 = vld [vmem:[#allocation7 + $0x188] sm:$0xff]
    %v266 = vld [vmem:[#allocation7 + $0x190] sm:$0xff]
    %v267 = vld [vmem:[#allocation7 + $0x198] sm:$0xff]
    %v268 = vld [vmem:[#allocation7 + $0x1a0] sm:$0xff]
    %v269 = vld [vmem:[#allocation7 + $0x1a8] sm:$0xff]
    %v270 = vld [vmem:[#allocation7 + $0x1b0] sm:$0xff]
    %v271 = vld [vmem:[#allocation7 + $0x1b8] sm:$0xff]
    %v272 = vld [vmem:[#allocation7 + $0x1c0] sm:$0xff]
    %v273 = vld [vmem:[#allocation7 + $0x1c8] sm:$0xff]
    %v274 = vld [vmem:[#allocation7 + $0x1d0] sm:$0xff]
    %v275 = vld [vmem:[#allocation7 + $0x1d8] sm:$0xff]
    %v276 = vld [vmem:[#allocation7 + $0x1e0] sm:$0xff]
    %v277 = vld [vmem:[#allocation7 + $0x1e8] sm:$0xff]
    %v278 = vld [vmem:[#allocation7 + $0x1f0] sm:$0xff]
    %v279 = vld [vmem:[#allocation7 + $0x1f8] sm:$0xff]
    %v280 = vld [vmem:[%s4] sm:$0x3]
    %v282 = vlaneseq
    %v283 = vshrl.u32 %v282, 7
    %v284 = vsub.s32 0, %v283
    %v285 = vrot.slane %v280, %v284
    %v286 = vlaneseq
    %v287 = vshrl.u32 %v286, 7
    %v288 = vsub.s32 1, %v287
    %v289 = vrot.slane %v280, %v288
    %292 = vmatprep.subr.mxu0 %v217
    %293 = vmatpush1.msra.mxu0 %v216
    %294 = vmatprep.subr.mxu0 %v219
    %295 = vmatpush1.msra.mxu0 %v218
    %296 = vmatprep.subr.mxu0 %v221
    %297 = vmatpush1.msra.mxu0 %v220
    %298 = vmatprep.subr.mxu0 %v223
    %299 = vmatpush1.msra.mxu0 %v222
    %300 = vmatprep.subr.mxu0 %v225
    %301 = vmatpush1.msra.mxu0 %v224
    %302 = vmatprep.subr.mxu0 %v227
    %303 = vmatpush1.msra.mxu0 %v226
    %304 = vmatprep.subr.mxu0 %v229
    %305 = vmatpush1.msra.mxu0 %v228
    %306 = vmatprep.subr.mxu0 %v231
    %307 = vmatpush1.msra.mxu0 %v230
    %308 = vmatprep.subr.mxu0 %v233
    %309 = vmatpush1.msra.mxu0 %v232
    %310 = vmatprep.subr.mxu0 %v235
    %311 = vmatpush1.msra.mxu0 %v234
    %312 = vmatprep.subr.mxu0 %v237
    %313 = vmatpush1.msra.mxu0 %v236
    %314 = vmatprep.subr.mxu0 %v239
    %315 = vmatpush1.msra.mxu0 %v238
    %316 = vmatprep.subr.mxu0 %v241
    %317 = vmatpush1.msra.mxu0 %v240
    %318 = vmatprep.subr.mxu0 %v243
    %319 = vmatpush1.msra.mxu0 %v242
    %320 = vmatprep.subr.mxu0 %v245
    %321 = vmatpush1.msra.mxu0 %v244
    %322 = vmatprep.subr.mxu0 %v247
    %323 = vmatpush1.msra.mxu0 %v246
    %324 = vmatprep.subr.mxu0 %v249
    %325 = vmatpush1.msra.mxu0 %v248
    %326 = vmatprep.subr.mxu0 %v251
    %327 = vmatpush1.msra.mxu0 %v250
    %328 = vmatprep.subr.mxu0 %v253
    %329 = vmatpush1.msra.mxu0 %v252
    %330 = vmatprep.subr.mxu0 %v255
    %331 = vmatpush1.msra.mxu0 %v254
    %332 = vmatprep.subr.mxu0 %v257
    %333 = vmatpush1.msra.mxu0 %v256
    %334 = vmatprep.subr.mxu0 %v259
    %335 = vmatpush1.msra.mxu0 %v258
    %336 = vmatprep.subr.mxu0 %v261
    %337 = vmatpush1.msra.mxu0 %v260
    %338 = vmatprep.subr.mxu0 %v263
    %339 = vmatpush1.msra.mxu0 %v262
    %340 = vmatprep.subr.mxu0 %v265
    %341 = vmatpush1.msra.mxu0 %v264
    %342 = vmatprep.subr.mxu0 %v267
    %343 = vmatpush1.msra.mxu0 %v266
    %344 = vmatprep.subr.mxu0 %v269
    %345 = vmatpush1.msra.mxu0 %v268
    %346 = vmatprep.subr.mxu0 %v271
    %347 = vmatpush1.msra.mxu0 %v270
    %348 = vmatprep.subr.mxu0 %v273
    %349 = vmatpush1.msra.mxu0 %v272
    %350 = vmatprep.subr.mxu0 %v275
    %351 = vmatpush1.msra.mxu0 %v274
    %352 = vmatprep.subr.mxu0 %v277
    %353 = vmatpush1.msra.mxu0 %v276
    %354 = vmatprep.subr.mxu0 %v279
    %355 = vmatpush1.msra.mxu0 %v278
    %356 = vmatprep.mubr.f32.mxu0 %v215
    %357 = vmatmul.mubr.f32.gmra.mrb[0].mxu0 %v214
    %v358 = vpop.f32.mrb[0].mxu0
    %v359 = vadd.f32 %v285, %v358
    %v360 = vpop.f32.mrb[0].mxu0
    %v361 = vadd.f32 %v289, %v360
    %362 = vdwg.mxu0
    %v363 = vmax.f32 %v359, 0.0
    %v364 = vmax.f32 %v361, 0.0
    %v365 = vld [vmem:[#allocation8] sm:$0xff]
    %v366 = vld [vmem:[#allocation8 + $0x8] sm:$0xff]
    %v367 = vld [vmem:[#allocation8 + $0x10] sm:$0xff]
    %v368 = vld [vmem:[#allocation8 + $0x18] sm:$0xff]
    %v369 = vld [vmem:[#allocation8 + $0x20] sm:$0xff]
    %v370 = vld [vmem:[#allocation8 + $0x28] sm:$0xff]
    %v371 = vld [vmem:[#allocation8 + $0x30] sm:$0xff]
    %v372 = vld [vmem:[#allocation8 + $0x38] sm:$0xff]
    %v373 = vld [vmem:[#allocation8 + $0x40] sm:$0xff]
    %v374 = vld [vmem:[#allocation8 + $0x48] sm:$0xff]
    %v375 = vld [vmem:[#allocation8 + $0x50] sm:$0xff]
    %v376 = vld [vmem:[#allocation8 + $0x58] sm:$0xff]
    %v377 = vld [vmem:[#allocation8 + $0x60] sm:$0xff]
    %v378 = vld [vmem:[#allocation8 + $0x68] sm:$0xff]
    %v379 = vld [vmem:[#allocation8 + $0x70] sm:$0xff]
    %v380 = vld [vmem:[#allocation8 + $0x78] sm:$0xff]
    %v381 = vld [vmem:[#allocation8 + $0x80] sm:$0xff]
    %v382 = vld [vmem:[#allocation8 + $0x88] sm:$0xff]
    %v383 = vld [vmem:[#allocation8 + $0x90] sm:$0xff]
    %v384 = vld [vmem:[#allocation8 + $0x98] sm:$0xff]
    %v385 = vld [vmem:[#allocation8 + $0xa0] sm:$0xff]
    %v386 = vld [vmem:[#allocation8 + $0xa8] sm:$0xff]
    %v387 = vld [vmem:[#allocation8 + $0xb0] sm:$0xff]
    %v388 = vld [vmem:[#allocation8 + $0xb8] sm:$0xff]
    %v389 = vld [vmem:[#allocation8 + $0xc0] sm:$0xff]
    %v390 = vld [vmem:[#allocation8 + $0xc8] sm:$0xff]
    %v391 = vld [vmem:[#allocation8 + $0xd0] sm:$0xff]
    %v392 = vld [vmem:[#allocation8 + $0xd8] sm:$0xff]
    %v393 = vld [vmem:[#allocation8 + $0xe0] sm:$0xff]
    %v394 = vld [vmem:[#allocation8 + $0xe8] sm:$0xff]
    %v395 = vld [vmem:[#allocation8 + $0xf0] sm:$0xff]
    %v396 = vld [vmem:[#allocation8 + $0xf8] sm:$0xff]
    %v397 = vld [vmem:[%s6] sm:$0x1]
    %v399 = vlaneseq
    %v400 = vshrl.u32 %v399, 7
    %v401 = vsub.s32 0, %v400
    %v402 = vrot.slane %v397, %v401
    %404 = vmatprep.subr.mxu0 0.0
    %405 = vmatpush1.msra.mxu0 %v365
    %406 = vmatprep.subr.mxu0 0.0
    %407 = vmatpush1.msra.mxu0 %v366
    %408 = vmatprep.subr.mxu0 0.0
    %409 = vmatpush1.msra.mxu0 %v367
    %410 = vmatprep.subr.mxu0 0.0
    %411 = vmatpush1.msra.mxu0 %v368
    %412 = vmatprep.subr.mxu0 0.0
    %413 = vmatpush1.msra.mxu0 %v369
    %414 = vmatprep.subr.mxu0 0.0
    %415 = vmatpush1.msra.mxu0 %v370
    %416 = vmatprep.subr.mxu0 0.0
    %417 = vmatpush1.msra.mxu0 %v371
    %418 = vmatprep.subr.mxu0 0.0
    %419 = vmatpush1.msra.mxu0 %v372
    %420 = vmatprep.subr.mxu0 0.0
    %421 = vmatpush1.msra.mxu0 %v373
    %422 = vmatprep.subr.mxu0 0.0
    %423 = vmatpush1.msra.mxu0 %v374
    %424 = vmatprep.subr.mxu0 0.0
    %425 = vmatpush1.msra.mxu0 %v375
    %426 = vmatprep.subr.mxu0 0.0
    %427 = vmatpush1.msra.mxu0 %v376
    %428 = vmatprep.subr.mxu0 0.0
    %429 = vmatpush1.msra.mxu0 %v377
    %430 = vmatprep.subr.mxu0 0.0
    %431 = vmatpush1.msra.mxu0 %v378
    %432 = vmatprep.subr.mxu0 0.0
    %433 = vmatpush1.msra.mxu0 %v379
    %434 = vmatprep.subr.mxu0 0.0
    %435 = vmatpush1.msra.mxu0 %v380
    %436 = vmatprep.subr.mxu0 0.0
    %437 = vmatpush1.msra.mxu0 %v381
    %438 = vmatprep.subr.mxu0 0.0
    %439 = vmatpush1.msra.mxu0 %v382
    %440 = vmatprep.subr.mxu0 0.0
    %441 = vmatpush1.msra.mxu0 %v383
    %442 = vmatprep.subr.mxu0 0.0
    %443 = vmatpush1.msra.mxu0 %v384
    %444 = vmatprep.subr.mxu0 0.0
    %445 = vmatpush1.msra.mxu0 %v385
    %446 = vmatprep.subr.mxu0 0.0
    %447 = vmatpush1.msra.mxu0 %v386
    %448 = vmatprep.subr.mxu0 0.0
    %449 = vmatpush1.msra.mxu0 %v387
    %450 = vmatprep.subr.mxu0 0.0
    %451 = vmatpush1.msra.mxu0 %v388
    %452 = vmatprep.subr.mxu0 0.0
    %453 = vmatpush1.msra.mxu0 %v389
    %454 = vmatprep.subr.mxu0 0.0
    %455 = vmatpush1.msra.mxu0 %v390
    %456 = vmatprep.subr.mxu0 0.0
    %457 = vmatpush1.msra.mxu0 %v391
    %458 = vmatprep.subr.mxu0 0.0
    %459 = vmatpush1.msra.mxu0 %v392
    %460 = vmatprep.subr.mxu0 0.0
    %461 = vmatpush1.msra.mxu0 %v393
    %462 = vmatprep.subr.mxu0 0.0
    %463 = vmatpush1.msra.mxu0 %v394
    %464 = vmatprep.subr.mxu0 0.0
    %465 = vmatpush1.msra.mxu0 %v395
    %466 = vmatprep.subr.mxu0 0.0
    %467 = vmatpush1.msra.mxu0 %v396
    %468 = vmatprep.mubr.f32.mxu0 %v364
    %469 = vmatmul.mubr.f32.gmra.mrb[0].mxu0 %v363
    %v470 = vpop.f32.mrb[0].mxu0
    %v471 = vadd.f32 %v402, %v470
    %v472 = vpop.f32.mrb[0].mxu0
    %473 = vdwg.mxu0
    %474 = vst [vmem:[#allocation10] sm:$0xff] %v471
    // Predicated region
    $region46: #{three_layer_net.1} parent=1 // pred_check
      _
    $region47: #{three_layer_net.1} parent=1 // pred_check_branch
      %476 = sbr.rel (0) target = $region49
    $region48: #{three_layer_net.1} parent=1 // pred_region
      %s478 = ssub.s32 128, 128
      %479 = vsyncadd [#allocation4], %s478
      %s481 = sshll.u32 [#allocation10], 4
      %s482 = int_to_ptr.vmem [resolvable:$true] %s481
      %484 = dma.vmem_to_hbm [thread:$0]  %s482, 128, %s7, [#allocation4]
    $region49: #{three_layer_net.1} parent=1 // pred_fallthru
      _
    // Predicated region
    $region50: #{three_layer_net.1} parent=1 // pred_check
      _
    $region51: #{three_layer_net.1} parent=1 // pred_check_branch
      %486 = sbr.rel (0) target = $region53
    $region52: #{three_layer_net.1} parent=1 // pred_region
      %487 = dma.done [#allocation4], 128
    $region53: #{three_layer_net.1} parent=1 // pred_fallthru
      _
    %488 = vsyncpa [#allocation3], 1
    %489 = vsyncpa [#allocation6], 1
    %490 = vsyncpa [#allocation9], 1
    %491 = vsyncpa [#allocation4], 1

</llo_original>
